<compile_context>
chip_gen: v7x
topology: tpu7x:2x2x1
jax: 0.10.0
libtpu: 0.0.40
codegen_flags: <defaults>
</compile_context>

<pallas_src>
import jax
import jax.numpy as jnp
from jax import lax
from jax.experimental import pallas as pl
from jax.experimental.pallas import tpu as pltpu

_LANES = 128
_TILE_BYTES = 4 * 1024 * 1024  # ~4 MiB tile; in+out double buffered = 16 MiB
_ON_TPU = jax.default_backend() == "tpu"


def _round_up(x, m):
    return -(-x // m) * m


def _layout(total, itemsize):
    """Lane-dense 2-D slab layout + block shape for a flat tensor of `total` elems."""
    lane = 512 if (total >= (1 << 19) and total % 512 == 0) else _LANES
    rows = -(-total // lane)

    target_rows = _round_up(max(16, _TILE_BYTES // (lane * itemsize)), 16)
    if rows < 64:
        # Tiny tensor: one full-dim block (always a legal block shape).
        block_rows = rows
    else:
        # >=2 grid steps so v7x's megacore can shard the (parallel) grid.
        half = _round_up(-(-rows // 2), 16)
        block_rows = min(target_rows, half)
    grid = -(-rows // block_rows)
    return lane, rows, block_rows, grid


def _dropout_kernel_hwprng(seed_ref, thr_ref, scale_ref, x_ref, o_ref):
    """TPU path: hardware PRNG -> memory-bound elementwise dropout."""
    blk = pl.program_id(0)
    pltpu.prng_seed(seed_ref[0], blk)
    raw = pltpu.prng_random_bits(x_ref.shape)
    if raw.dtype != jnp.int32:
        raw = pltpu.bitcast(raw, jnp.int32)
    bits23 = jnp.bitwise_and(raw, jnp.int32(0x7FFFFF))  # uniform in [0, 2^23)
    keep = bits23 >= thr_ref[0]                          # P(keep) = 1 - p

    x = x_ref[...].astype(jnp.float32)
    out = jnp.where(keep, x * scale_ref[0], jnp.float32(0.0))
    o_ref[...] = out.astype(o_ref.dtype)


def _dropout_kernel_hash(seed_ref, thr_ref, scale_ref, x_ref, o_ref):
    """Portable fallback (interpret / non-TPU): counter-based integer hash."""
    block_rows, lane = x_ref.shape
    blk = pl.program_id(0)

    c_mul = jnp.int32(-1640531527)  # 0x9E3779B9
    key = seed_ref[0] * jnp.int32(-1640531535) + jnp.int32(-2048144777)

    # Factor idx = (row*lane + col) into a per-row and a per-col term so the
    # expensive multiplies run on (block_rows,1)/(1,lane) shapes, not the full tile.
    row_ids = lax.broadcasted_iota(jnp.int32, (block_rows, 1), 0) + blk * block_rows
    col_ids = lax.broadcasted_iota(jnp.int32, (1, lane), 1)
    row_term = (row_ids * jnp.int32(lane)) * c_mul + key
    col_term = col_ids * c_mul

    h = row_term + col_term  # broadcast add -> full tile
    # lowbias32-style finalizer (2 rounds), all int32 VPU ops.
    h = h ^ lax.shift_right_logical(h, jnp.int32(16))
    h = h * jnp.int32(0x7FEB352D)
    h = h ^ lax.shift_right_logical(h, jnp.int32(15))
    h = h * jnp.int32(-2073254261)  # 0x846CA68B
    h = h ^ lax.shift_right_logical(h, jnp.int32(16))
    bits23 = lax.shift_right_logical(h, jnp.int32(9))    # uniform in [0, 2^23)
    keep = bits23 >= thr_ref[0]                           # P(keep) = 1 - p

    x = x_ref[...].astype(jnp.float32)
    out = jnp.where(keep, x * scale_ref[0], jnp.float32(0.0))
    o_ref[...] = out.astype(o_ref.dtype)


@jax.jit
def _dropout_pallas(x, p, seed):
    """Dropout with probability `p` on `x` (any shape). Only called when p > 0."""
    orig_shape = x.shape
    total = x.size
    itemsize = jnp.dtype(x.dtype).itemsize
    lane, rows, block_rows, grid = _layout(total, itemsize)
    padded = rows * lane

    flat = x.reshape(-1)
    if padded != total:
        # TODO(synk): handle the sub-lane tail with a tiny separate op instead of a
        # full pad/slice round trip (extra HBM copies) for sizes not divisible by 128.
        flat = jnp.pad(flat, (0, padded - total))
    x2d = flat.reshape(rows, lane)

    # Integer threshold + precomputed scale; p is quantized to multiples of 2^-23.
    p32 = jnp.clip(jnp.asarray(p, jnp.float32), 0.0, 1.0)
    thr = jnp.round(p32 * jnp.float32(1 << 23)).astype(jnp.int32)
    scale = jnp.where(
        p32 < 1.0, 1.0 / jnp.maximum(1.0 - p32, jnp.float32(1e-12)), jnp.float32(0.0)
    ).astype(jnp.float32)

    seed_arr = jnp.reshape(jnp.asarray(seed, jnp.int32), (1,))
    thr_arr = jnp.reshape(thr, (1,))
    scale_arr = jnp.reshape(scale, (1,))

    kernel = _dropout_kernel_hwprng if _ON_TPU else _dropout_kernel_hash

    out2d = pl.pallas_call(
        kernel,
        out_shape=jax.ShapeDtypeStruct((rows, lane), x.dtype),
        grid_spec=pltpu.PrefetchScalarGridSpec(
            num_scalar_prefetch=3,
            grid=(grid,),
            in_specs=[pl.BlockSpec((block_rows, lane), lambda i, *_: (i, 0))],
            out_specs=pl.BlockSpec((block_rows, lane), lambda i, *_: (i, 0)),
        ),
        compiler_params=pltpu.CompilerParams(
            dimension_semantics=("parallel",),      # independent blocks -> v7x megacore
            vmem_limit_bytes=32 * 1024 * 1024,      # 4 buffers x 4 MiB fits on v5e too
        ),
    )(seed_arr, thr_arr, scale_arr, x2d)

    out = out2d.reshape(-1)
    if padded != total:
        out = out[:total]
    return out.reshape(orig_shape)


def dynamic_dropout_forward(x, p, seed=0, training=True):
    """Functional entry point: identity when not training or p <= 0."""
    p = float(p)
    if not training or p <= 0.0:
        return x
    return _dropout_pallas(x, jnp.float32(p), jnp.int32(seed))


class DynamicDropout:
    """JAX/Pallas port of the PyTorch DynamicDropout module (forward = nn.Dropout(p))."""

    def __init__(self, initial_p=0.0, adjustment_rate=0.02, max_p=0.1):
        self.p = float(initial_p)
        self.adjustment_rate = adjustment_rate
        self.max_p = max_p
        self._step = 0  # fallback per-call seed so masks differ across calls

    def __call__(self, x, seed=None, training=True):
        # Host-side fast path: eval mode and the module-default p == 0 are identity,
        # so skip the pallas_call entirely (no HBM read+write).
        if not training or self.p <= 0.0:
            return x
        if seed is None:
            seed = self._step
            self._step += 1
        return _dropout_pallas(x, jnp.float32(self.p), jnp.int32(seed))

    def increase_dropout(self):
        if self.p != self.max_p:
            check = self.p + self.adjustment_rate
            self.p = self.max_p if check > self.max_p else check
            print(f"Dropout increased to {self.p}")

    def decrease_dropout(self):
        if self.p != 0:
            check = self.p - self.adjustment_rate
            self.p = 0.0 if check < 0 else check
            print(f"Dropout decreased to {self.p}")

    def reset_dropout(self):
        self.p = 0.0


if __name__ == "__main__":
    key = jax.random.PRNGKey(0)
    # Small NCHW input consistent with the module's typical use.
    x = jax.random.normal(key, (2, 4, 16, 16), dtype=jnp.float32)

    module = DynamicDropout(initial_p=0.0, adjustment_rate=0.02, max_p=0.1)

    # Default p = 0 -> identity (kernel skipped host-side, matches torch nn.Dropout(0)).
    y0 = module(x, seed=0, training=True)
    jax.block_until_ready(y0)
    assert jnp.allclose(y0, x), "p=0 dropout must be identity"

    # Exercise the dynamic-p path: bump p to max_p (0.1) and run the kernel.
    for _ in range(5):
        module.increase_dropout()
    y1 = module(x, seed=123, training=True)
    jax.block_until_ready(y1)

    # Surviving elements are scaled by 1/(1-p); dropped ones are exactly 0.
    scale = 1.0 / (1.0 - module.p)
    kept = y1 != 0
    assert jnp.allclose(
        jnp.where(kept, y1, x * scale), x * scale, rtol=1e-5, atol=1e-5
    ), "kept elements must equal x / (1 - p)"
    n_dropped = int(jnp.sum(~kept))
    assert 0 < n_dropped < x.size // 2, f"unexpected drop count {n_dropped}"

    # Eval mode is identity regardless of p.
    y2 = module(x, seed=7, training=False)
    jax.block_until_ready(y2)
    assert jnp.allclose(y2, x)

    print("KERNEL_OK")
</pallas_src>

<mosaic_0001>
module attributes {stable_mosaic.version = 11 : i64} {
  func.func @_dropout_kernel_hash(%arg0: i32, %arg1: memref<1xi32, #tpu.memory_space<smem>>, %arg2: memref<1xi32, #tpu.memory_space<smem>>, %arg3: memref<1xf32, #tpu.memory_space<smem>>, %arg4: memref<16x128xf32, #tpu.memory_space<vmem>>, %arg5: memref<16x128xf32, #tpu.memory_space<vmem>>) attributes {dimension_semantics = [#tpu.dimension_semantics<parallel>], iteration_bounds = array<i64: 1>, scalar_prefetch = 3 : i64, scratch_operands = 0 : i64, tpu.core_type = #tpu.core_type<tc>, window_params = [{transform_indices = @transform_0, window_bounds = array<i64: 16, 128>}, {transform_indices = @transform_1, window_bounds = array<i64: 16, 128>}]} {
    %c0 = arith.constant 0 : index
    %0 = memref.load %arg1[%c0] : memref<1xi32, #tpu.memory_space<smem>>
    %c-1640531535_i32 = arith.constant -1640531535 : i32
    %1 = arith.muli %0, %c-1640531535_i32 : i32
    %c-2048144777_i32 = arith.constant -2048144777 : i32
    %2 = arith.addi %1, %c-2048144777_i32 : i32
    %3 = tpu.iota {dimensions = array<i32: 0>} : vector<16x1xi32>
    %c16_i32 = arith.constant 16 : i32
    %4 = arith.muli %arg0, %c16_i32 : i32
    %5 = vector.broadcast %4 : i32 to vector<16x1xi32>
    %6 = arith.addi %3, %5 : vector<16x1xi32>
    %7 = tpu.iota {dimensions = array<i32: 1>} : vector<1x128xi32>
    %c128_i32 = arith.constant 128 : i32
    %8 = vector.broadcast %c128_i32 : i32 to vector<16x1xi32>
    %9 = arith.muli %6, %8 : vector<16x1xi32>
    %c-1640531527_i32 = arith.constant -1640531527 : i32
    %10 = vector.broadcast %c-1640531527_i32 : i32 to vector<16x1xi32>
    %11 = arith.muli %9, %10 : vector<16x1xi32>
    %12 = vector.broadcast %2 : i32 to vector<16x1xi32>
    %13 = arith.addi %11, %12 : vector<16x1xi32>
    %c-1640531527_i32_0 = arith.constant -1640531527 : i32
    %14 = vector.broadcast %c-1640531527_i32_0 : i32 to vector<1x128xi32>
    %15 = arith.muli %7, %14 : vector<1x128xi32>
    %16 = vector.broadcast %13 : vector<16x1xi32> to vector<16x128xi32>
    %17 = vector.broadcast %15 : vector<1x128xi32> to vector<16x128xi32>
    %18 = arith.addi %16, %17 : vector<16x128xi32>
    %c16_i32_1 = arith.constant 16 : i32
    %19 = vector.broadcast %c16_i32_1 : i32 to vector<16x128xi32>
    %20 = arith.shrui %18, %19 : vector<16x128xi32>
    %21 = arith.xori %18, %20 : vector<16x128xi32>
    %c2146121005_i32 = arith.constant 2146121005 : i32
    %22 = vector.broadcast %c2146121005_i32 : i32 to vector<16x128xi32>
    %23 = arith.muli %21, %22 : vector<16x128xi32>
    %c15_i32 = arith.constant 15 : i32
    %24 = vector.broadcast %c15_i32 : i32 to vector<16x128xi32>
    %25 = arith.shrui %23, %24 : vector<16x128xi32>
    %26 = arith.xori %23, %25 : vector<16x128xi32>
    %c-2073254261_i32 = arith.constant -2073254261 : i32
    %27 = vector.broadcast %c-2073254261_i32 : i32 to vector<16x128xi32>
    %28 = arith.muli %26, %27 : vector<16x128xi32>
    %c16_i32_2 = arith.constant 16 : i32
    %29 = vector.broadcast %c16_i32_2 : i32 to vector<16x128xi32>
    %30 = arith.shrui %28, %29 : vector<16x128xi32>
    %31 = arith.xori %28, %30 : vector<16x128xi32>
    %c9_i32 = arith.constant 9 : i32
    %32 = vector.broadcast %c9_i32 : i32 to vector<16x128xi32>
    %33 = arith.shrui %31, %32 : vector<16x128xi32>
    %c0_3 = arith.constant 0 : index
    %34 = memref.load %arg2[%c0_3] : memref<1xi32, #tpu.memory_space<smem>>
    %35 = vector.broadcast %34 : i32 to vector<16x128xi32>
    %36 = arith.cmpi sge, %33, %35 : vector<16x128xi32>
    %c0_4 = arith.constant 0 : index
    %c0_5 = arith.constant 0 : index
    %37 = vector.load %arg4[%c0_4, %c0_5] : memref<16x128xf32, #tpu.memory_space<vmem>>, vector<16x128xf32>
    %c0_6 = arith.constant 0 : index
    %38 = memref.load %arg3[%c0_6] : memref<1xf32, #tpu.memory_space<smem>>
    %39 = vector.broadcast %38 : f32 to vector<16x128xf32>
    %40 = arith.mulf %37, %39 : vector<16x128xf32>
    %cst = arith.constant 0.000000e+00 : f32
    %41 = vector.broadcast %cst : f32 to vector<16x128xf32>
    %42 = arith.select %36, %40, %41 : vector<16x128xi1>, vector<16x128xf32>
    %c0_7 = arith.constant 0 : index
    %c0_8 = arith.constant 0 : index
    %43 = vector.load %arg5[%c0_7, %c0_8] : memref<16x128xf32, #tpu.memory_space<vmem>>, vector<16x128xf32>
    tpu.vector_store %arg5[%c0_7, %c0_8], %42 {strides = array<i32>} : memref<16x128xf32, #tpu.memory_space<vmem>>, vector<16x128xf32>,
    return
  }
  func.func @transform_0(%arg0: i32, %arg1: memref<1xi32, #tpu.memory_space<smem>>, %arg2: memref<1xi32, #tpu.memory_space<smem>>, %arg3: memref<1xf32, #tpu.memory_space<smem>>) -> (i32, i32) {
    %c0_i32 = arith.constant 0 : i32
    %c0_i32_0 = arith.constant 0 : i32
    return %arg0, %c0_i32 : i32, i32
  }
  func.func @transform_1(%arg0: i32, %arg1: memref<1xi32, #tpu.memory_space<smem>>, %arg2: memref<1xi32, #tpu.memory_space<smem>>, %arg3: memref<1xf32, #tpu.memory_space<smem>>) -> (i32, i32) {
    %c0_i32 = arith.constant 0 : i32
    %c0_i32_0 = arith.constant 0 : i32
    return %arg0, %c0_i32 : i32, i32
  }
}

</mosaic_0001>

<llo_original>
// kernel: _dropout_pallas.1
$region0: #{_dropout_pallas.1}
  #allocation0 [shape = 'u32[]', space=smem, size = 0x4, offset = 0x4, fixed_abs, tag = 'smem constant byte address 0x4 - core index']
  #allocation1 [shape = 'u32[144,128]{1,0:T(1,128)}', space=vmem, size = 0x12000, scoped, tag = 'internal scratch']
  #allocation2 [shape = 's32[1]{0}', space=sflag, size = 0x4, scoped, tag = 'scoped memory for _dropout_pallas.1']
  #allocation3 [shape = 's32[1]{0:T(128)S(6)}', space=smem, size = 0x200, scoped, tag = 'prefetched SMEM operand 0']
  #allocation4 [shape = 's32[1]{0:T(128)S(6)}', space=smem, size = 0x200, scoped, tag = 'prefetched SMEM operand 1']
  #allocation5 [shape = 'f32[1]{0:T(128)S(6)}', space=smem, size = 0x200, scoped, tag = 'prefetched SMEM operand 2']
  %s0 = inlined_call_operand.<no memory space> [shape: s32[1], index: 0, kind: input, shape index: {}]
  %s1 = inlined_call_operand.<no memory space> [shape: s32[1], index: 1, kind: input, shape index: {}]
  %s2 = inlined_call_operand.<no memory space> [shape: f32[1], index: 2, kind: input, shape index: {}]
  %s3 = inlined_call_operand.vmem [shape: f32[16,128], index: 3, kind: input, shape index: {}]
  %s4 = inlined_call_operand.vmem [shape: f32[16,128], index: 4, kind: output, shape index: {}]
  %s5 = sld [smem:[#allocation0]]
  $region14: #{_dropout_pallas.1} parent=0
    _
  %s7 = ssub.s32 1, %s5
  %s8 = scalar_select 0, %s7, %s5
  %9 = sst [smem:[#allocation3]] %s0
  %10 = sst [smem:[#allocation4]] %s1
  %11 = sst [smem:[#allocation5]] %s2
  // Predicated region
  $region2: #{_dropout_pallas.1} parent=0 // pred_check
    _
  $region3: #{_dropout_pallas.1} parent=0 // pred_check_branch
    %13 = sbr.rel (0) target = $region5
  $region4: #{_dropout_pallas.1} parent=0 // pred_region
    _
  $region5: #{_dropout_pallas.1} parent=0 // pred_fallthru
    _
  %s14 = sld [smem:[#allocation3]]
  %s15 = smul.u32 %s14, 2654435761
  %s16 = sadd.s32 %s15, 2246822519
  %v17 = vlaneseq
  %v18 = vshrl.u32 %v17, 7
  %v19 = vadd.s32 %v18, 8
  %s20 = smul.u32 0, 16
  %v21 = vstv %s20
  %v22 = vadd.s32 %v18, %v21
  %v23 = vadd.s32 %v19, %v21
  %v24 = vlaneseq
  %v25 = vand.u32 %v24, 127
  %v26 = vmul.u32 %v22, 128
  %v27 = vmul.u32 %v23, 128
  %v28 = vmul.u32 %v26, 2654435769
  %v29 = vmul.u32 %v27, 2654435769
  %v30 = vstv %s16
  %v31 = vadd.s32 %v28, %v30
  %v32 = vadd.s32 %v29, %v30
  %v33 = vmul.u32 %v25, 2654435769
  %v34 = vadd.s32 %v31, %v33
  %v35 = vadd.s32 %v32, %v33
  %v36 = vshrl.u32 %v34, 16
  %v37 = vshrl.u32 %v35, 16
  %v38 = vxor.u32 %v34, %v36
  %v39 = vxor.u32 %v35, %v37
  %v40 = vmul.u32 %v38, 2146121005
  %v41 = vmul.u32 %v39, 2146121005
  %v42 = vshrl.u32 %v40, 15
  %v43 = vshrl.u32 %v41, 15
  %v44 = vxor.u32 %v40, %v42
  %v45 = vxor.u32 %v41, %v43
  %v46 = vmul.u32 %v44, 2221713035
  %v47 = vmul.u32 %v45, 2221713035
  %v48 = vshrl.u32 %v46, 16
  %v49 = vshrl.u32 %v47, 16
  %v50 = vxor.u32 %v46, %v48
  %v51 = vxor.u32 %v47, %v49
  %v52 = vshrl.u32 %v50, 9
  %v53 = vshrl.u32 %v51, 9
  %s54 = sld [smem:[#allocation4]]
  %v55 = vstv %s54
  %vm56 = vcmp.ge.s32.totalorder %v52, %v55
  %vm57 = vcmp.ge.s32.totalorder %v53, %v55
  %v58 = vld [vmem:[%s3] sm:$0xff]
  %v59 = vld [vmem:[%s3 + $0x8] sm:$0xff]
  %s60 = sld [smem:[#allocation5]]
  %v61 = vstv %s60
  %v62 = vmul.f32 %v58, %v61
  %v63 = vmul.f32 %v59, %v61
  %v64 = vsel %vm56, %v62, 0.0
  %v65 = vsel %vm57, %v63, 0.0
  %66 = vst [vmem:[%s4] sm:$0xff] %v64
  %67 = vst [vmem:[%s4 + $0x8] sm:$0xff] %v65
  // Predicated region
  $region6: #{_dropout_pallas.1} parent=0 // pred_check
    _
  $region7: #{_dropout_pallas.1} parent=0 // pred_check_branch
    %69 = sbr.rel (0) target = $region9
  $region8: #{_dropout_pallas.1} parent=0 // pred_region
    _
  $region9: #{_dropout_pallas.1} parent=0 // pred_fallthru
    _
  // Predicated region
  $region10: #{_dropout_pallas.1} parent=0 // pred_check
    _
  $region11: #{_dropout_pallas.1} parent=0 // pred_check_branch
    %71 = sbr.rel (0) target = $region13
  $region12: #{_dropout_pallas.1} parent=0 // pred_region
    _
  $region13: #{_dropout_pallas.1} parent=0 // pred_fallthru
    _

</llo_original>
